<compile_context>
chip_gen: v7x
topology: tpu7x:2x2x1
jax: 0.10.0
libtpu: 0.0.40
codegen_flags: <defaults>
</compile_context>

<pallas_src>
import jax
import jax.numpy as jnp
from jax.experimental import pallas as pl
from jax.experimental.pallas import tpu as pltpu

_LANE = 128
_MAX_STRIPS = 128          # cap on 128-lane strips per reduction tile (unrolled)


def _round_up(x, m):
    return (x + m - 1) // m * m


def _round_down(x, m):
    return (x // m) * m


def _chip_block_budget():
    """Return (per-block input budget in bytes across fused streams, is_v7x)."""
    try:
        kind = jax.devices()[0].device_kind.lower()
    except Exception:
        kind = ""
    if "v7" in kind:
        # 2 x 8 MiB double-buffered inputs stay well under the 32 MiB scoped VMEM.
        return 8 * 1024 * 1024, True
    # v5e / v6e (and unknown): 2 x 4 MiB fits v5e's 16 MiB scoped default;
    # measured gain past 4 MiB on v6e is marginal.
    return 4 * 1024 * 1024, False


def _choose_tiles(R, L, itemsize, n_streams):
    """Pick (TM, TK) for an (R, L) row-mean reduction fused over n streams."""
    budget_bytes, is_v7x = _chip_block_budget()
    per_stream = max(budget_bytes // max(n_streams, 1), 512 * 1024)
    elems = per_stream // itemsize                # elements / block / stream
    padded_l = _round_up(L, _LANE)                # lane padding in VMEM
    g = max(8, 32 // itemsize)                    # sublane granularity for dtype

    tm_full = elems // padded_l                   # rows per block if TK == L

    if tm_full >= R or tm_full >= g:
        # Single reduction tile over the whole H*W extent.
        tk = L
        tm = R if tm_full >= R else _round_down(tm_full, g)
    else:
        # H*W too large for a budget-sized single block: tile the reduction.
        tm = R if R <= 256 else 256
        tk = _round_down(max(elems // max(tm, 1), _LANE), _LANE)
        tk = max(min(tk, _MAX_STRIPS * _LANE), _LANE)

    # v7x has two TensorCores: keep the parallel (row) grid axis >= 2 so the
    # megacore sharding has something to split.  v5e/v6e are unaffected.
    if is_v7x and tm >= R and R >= 2 * g:
        tm = _round_up(pl.cdiv(R, 2), g)
    return tm, tk, is_v7x


def _row_means_multi(xs2d):
    """Row means of n same-shaped (R, L) arrays via one pallas_call."""
    n = len(xs2d)
    R, L = xs2d[0].shape
    itemsize = jnp.dtype(xs2d[0].dtype).itemsize
    tm, tk, _ = _choose_tiles(R, L, itemsize, n)
    inv_n = 1.0 / float(L)

    out_shape = tuple(jax.ShapeDtypeStruct((R, 1), x.dtype) for x in xs2d)

    if tk == L:
        # ---------- Single reduction tile: 1-D grid, no scratch. ----------
        def kernel(*refs):
            x_refs, o_refs = refs[:n], refs[n:]
            for x_ref, o_ref in zip(x_refs, o_refs):
                s = jnp.sum(x_ref[...].astype(jnp.float32), axis=1,
                            keepdims=True)
                o_ref[...] = (s * inv_n).astype(o_ref.dtype)

        grid = (pl.cdiv(R, tm),)
        in_specs = [pl.BlockSpec((tm, L), lambda r: (r, 0)) for _ in range(n)]
        out_specs = tuple(pl.BlockSpec((tm, 1), lambda r: (r, 0))
                          for _ in range(n))
        scratch_shapes = []
        dim_sem = ("parallel",)
    else:
        # ---------- Tiled reduction: 2-D grid, reduction axis last. ----------
        nk = pl.cdiv(L, tk)
        n_strips = tk // _LANE
        rem = L - (nk - 1) * tk          # valid columns in the last K tile
        rem_full = rem // _LANE          # full 128-lane strips in that tile
        rem_tail = rem % _LANE           # width of its final partial strip

        def strip_sum(x_ref, count):
            # Sum `count` (static) 128-lane column strips: VPU adds only,
            # no per-step cross-lane (XLU) reduce.
            total = jnp.zeros((tm, _LANE), jnp.float32)
            for s in range(count):
                total = total + x_ref[:, s * _LANE:(s + 1) * _LANE].astype(
                    jnp.float32)
            return total

        def kernel(*refs):
            x_refs = refs[:n]
            o_refs = refs[n:2 * n]
            acc_refs = refs[2 * n:]
            k = pl.program_id(1)
            last = pl.num_programs(1) - 1

            @pl.when(k == 0)
            def _init():
                for acc in acc_refs:
                    acc[...] = jnp.zeros_like(acc)

            if rem == tk:
                # H*W divides evenly by TK: every tile is full, no masking.
                for x_ref, acc in zip(x_refs, acc_refs):
                    acc[...] += strip_sum(x_ref, n_strips)
            else:
                @pl.when(k != last)
                def _full_tile():
                    for x_ref, acc in zip(x_refs, acc_refs):
                        acc[...] += strip_sum(x_ref, n_strips)

                @pl.when(k == last)
                def _last_tile():
                    # Only the final tile touches padded columns: read just the
                    # valid full strips and mask the single partial strip.
                    for x_ref, acc in zip(x_refs, acc_refs):
                        part = strip_sum(x_ref, rem_full)
                        if rem_tail:
                            col = jax.lax.broadcasted_iota(
                                jnp.int32, (tm, _LANE), 1)
                            tail = x_ref[:, rem_full * _LANE:
                                         (rem_full + 1) * _LANE]
                            part = part + jnp.where(
                                col < rem_tail, tail.astype(jnp.float32), 0.0)
                        acc[...] += part

            @pl.when(k == last)
            def _finalize():
                for acc, o_ref in zip(acc_refs, o_refs):
                    s = jnp.sum(acc[...], axis=1, keepdims=True)
                    o_ref[...] = (s * inv_n).astype(o_ref.dtype)

        grid = (pl.cdiv(R, tm), nk)
        in_specs = [pl.BlockSpec((tm, tk), lambda r, k: (r, k))
                    for _ in range(n)]
        # Output block kept lane-sparse (TM, 1): written once per row tile,
        # negligible vs the streamed input, avoids a sublane->lane relayout.
        out_specs = tuple(pl.BlockSpec((tm, 1), lambda r, k: (r, 0))
                          for _ in range(n))
        scratch_shapes = [pltpu.VMEM((tm, _LANE), jnp.float32)
                          for _ in range(n)]
        dim_sem = ("parallel", "arbitrary")

    outs = pl.pallas_call(
        kernel,
        out_shape=out_shape,
        grid_spec=pltpu.PrefetchScalarGridSpec(
            num_scalar_prefetch=0,
            grid=grid,
            in_specs=in_specs,
            out_specs=out_specs,
            scratch_shapes=scratch_shapes,
        ),
        compiler_params=pltpu.CompilerParams(dimension_semantics=dim_sem),
    )(*xs2d)
    if not isinstance(outs, (tuple, list)):
        outs = (outs,)
    return [o.reshape(R) for o in outs]


@jax.jit
def _avg_pool_group(*xs):
    """Global average pool + flatten for n same-shaped NCHW arrays."""
    B, C, H, W = xs[0].shape
    flat = [x.reshape(B * C, H * W) for x in xs]   # free reshape inside jit
    means = _row_means_multi(flat)
    return tuple(m.reshape(B, C) for m in means)


def avg_parallel(x_parallel):
    """Pallas equivalent of AvgParallel(nn.AdaptiveAvgPool2d(1)).forward.

    Takes a list of NCHW tensors, returns a list of (B, C) tensors
    (the module output flattened with .view(B, -1))."""
    xs = list(x_parallel)
    if not xs:
        return []

    shape0, dtype0 = xs[0].shape, xs[0].dtype
    same = all(x.shape == shape0 and x.dtype == dtype0 for x in xs)
    budget_bytes, _ = _chip_block_budget()
    fuse_max_bytes = 4 * budget_bytes   # fuse only small streams; large ones
                                        # amortize launch overhead on their own
    if same and len(shape0) == 4 and len(xs) > 1:
        per_stream_bytes = int(jnp.dtype(dtype0).itemsize)
        for d in shape0:
            per_stream_bytes *= int(d)
        if per_stream_bytes <= fuse_max_bytes:
            # One pallas_call, n input refs / n output refs (no stack copy).
            return list(_avg_pool_group(*xs))

    # Per-stream calls (large or heterogeneous inputs).
    return [_avg_pool_group(x)[0] for x in xs]


if __name__ == "__main__":
    key = jax.random.PRNGKey(0)
    k1, k2, k3, k4 = jax.random.split(key, 4)

    # Primary case: two parallel modality streams, (B=2, C=4, H=16, W=16),
    # exercising the fused multi-ref single pallas_call path.
    x0 = jax.random.normal(k1, (2, 4, 16, 16), dtype=jnp.float32)
    x1 = jax.random.normal(k2, (2, 4, 16, 16), dtype=jnp.float32)
    outs = avg_parallel([x0, x1])
    outs = [jax.block_until_ready(o) for o in outs]
    refs = [jnp.mean(x, axis=(2, 3)) for x in (x0, x1)]
    for o, r in zip(outs, refs):
        assert o.shape == r.shape, (o.shape, r.shape)
        assert jnp.allclose(o, r, atol=1e-5, rtol=1e-5)

    # Secondary: adaptive row tiling with a partial row tile (single-pass path).
    xb = jax.random.normal(k3, (2, 300, 46, 46), dtype=jnp.float32)
    (ob,) = avg_parallel([xb])
    ob = jax.block_until_ready(ob)
    rb = jnp.mean(xb, axis=(2, 3))
    assert ob.shape == rb.shape, (ob.shape, rb.shape)
    assert jnp.allclose(ob, rb, atol=1e-5, rtol=1e-5)

    # Tertiary: huge H*W to exercise the tiled-reduction kernel
    # (lane-dense accumulator, masked final strip of the final K tile).
    xc = jax.random.normal(k4, (1, 32, 260, 260), dtype=jnp.float32)
    (oc,) = avg_parallel([xc])
    oc = jax.block_until_ready(oc)
    rc = jnp.mean(xc, axis=(2, 3))
    assert oc.shape == rc.shape, (oc.shape, rc.shape)
    assert jnp.allclose(oc, rc, atol=1e-5, rtol=1e-5)

    print("KERNEL_OK")
</pallas_src>

<mosaic_0001>
module attributes {stable_mosaic.version = 11 : i64} {
  func.func @kernel(%arg0: i32, %arg1: memref<8x256xf32, #tpu.memory_space<vmem>>, %arg2: memref<8x256xf32, #tpu.memory_space<vmem>>, %arg3: memref<8x1xf32, #tpu.memory_space<vmem>>, %arg4: memref<8x1xf32, #tpu.memory_space<vmem>>) attributes {dimension_semantics = [#tpu.dimension_semantics<parallel>], iteration_bounds = array<i64: 1>, scalar_prefetch = 0 : i64, scratch_operands = 0 : i64, tpu.core_type = #tpu.core_type<tc>, window_params = [{transform_indices = @transform_0, window_bounds = array<i64: 8, 256>}, {transform_indices = @transform_1, window_bounds = array<i64: 8, 256>}, {transform_indices = @transform_2, window_bounds = array<i64: 8, 1>}, {transform_indices = @transform_3, window_bounds = array<i64: 8, 1>}]} {
    %c0 = arith.constant 0 : index
    %c0_0 = arith.constant 0 : index
    %0 = vector.load %arg1[%c0, %c0_0] : memref<8x256xf32, #tpu.memory_space<vmem>>, vector<8x256xf32>
    %cst = arith.constant dense<0.000000e+00> : vector<8xf32>
    %1 = vector.multi_reduction <add>, %0, %cst [1] : vector<8x256xf32> to vector<8xf32>
    %2 = vector.shape_cast %1 : vector<8xf32> to vector<8x1xf32>
    %cst_1 = arith.constant 3.906250e-03 : f32
    %3 = vector.broadcast %cst_1 : f32 to vector<8x1xf32>
    %4 = arith.mulf %2, %3 : vector<8x1xf32>
    %c0_2 = arith.constant 0 : index
    %c0_3 = arith.constant 0 : index
    %5 = vector.load %arg3[%c0_2, %c0_3] : memref<8x1xf32, #tpu.memory_space<vmem>>, vector<8x1xf32>
    tpu.vector_store %arg3[%c0_2, %c0_3], %4 {strides = array<i32>} : memref<8x1xf32, #tpu.memory_space<vmem>>, vector<8x1xf32>,
    %c0_4 = arith.constant 0 : index
    %c0_5 = arith.constant 0 : index
    %6 = vector.load %arg2[%c0_4, %c0_5] : memref<8x256xf32, #tpu.memory_space<vmem>>, vector<8x256xf32>
    %cst_6 = arith.constant dense<0.000000e+00> : vector<8xf32>
    %7 = vector.multi_reduction <add>, %6, %cst_6 [1] : vector<8x256xf32> to vector<8xf32>
    %8 = vector.shape_cast %7 : vector<8xf32> to vector<8x1xf32>
    %cst_7 = arith.constant 3.906250e-03 : f32
    %9 = vector.broadcast %cst_7 : f32 to vector<8x1xf32>
    %10 = arith.mulf %8, %9 : vector<8x1xf32>
    %c0_8 = arith.constant 0 : index
    %c0_9 = arith.constant 0 : index
    %11 = vector.load %arg4[%c0_8, %c0_9] : memref<8x1xf32, #tpu.memory_space<vmem>>, vector<8x1xf32>
    tpu.vector_store %arg4[%c0_8, %c0_9], %10 {strides = array<i32>} : memref<8x1xf32, #tpu.memory_space<vmem>>, vector<8x1xf32>,
    return
  }
  func.func @transform_0(%arg0: i32) -> (i32, i32) {
    %c0_i32 = arith.constant 0 : i32
    %c0_i32_0 = arith.constant 0 : i32
    return %arg0, %c0_i32 : i32, i32
  }
  func.func @transform_1(%arg0: i32) -> (i32, i32) {
    %c0_i32 = arith.constant 0 : i32
    %c0_i32_0 = arith.constant 0 : i32
    return %arg0, %c0_i32 : i32, i32
  }
  func.func @transform_2(%arg0: i32) -> (i32, i32) {
    %c0_i32 = arith.constant 0 : i32
    %c0_i32_0 = arith.constant 0 : i32
    return %arg0, %c0_i32 : i32, i32
  }
  func.func @transform_3(%arg0: i32) -> (i32, i32) {
    %c0_i32 = arith.constant 0 : i32
    %c0_i32_0 = arith.constant 0 : i32
    return %arg0, %c0_i32 : i32, i32
  }
}

</mosaic_0001>

<llo_original>
// kernel: _avg_pool_group.1
$region0: #{_avg_pool_group.1}
  #allocation0 [shape = 'u32[]', space=smem, size = 0x4, offset = 0x4, fixed_abs, tag = 'smem constant byte address 0x4 - core index']
  #allocation1 [shape = 'u32[144,128]{1,0:T(1,128)}', space=vmem, size = 0x12000, scoped, tag = 'internal scratch']
  %s0 = inlined_call_operand.vmem [shape: f32[8,256], index: 0, kind: input, shape index: {}]
  %s1 = inlined_call_operand.vmem [shape: f32[8,256], index: 1, kind: input, shape index: {}]
  %s2 = inlined_call_operand.vmem [shape: f32[8,1], index: 2, kind: output, shape index: {0}]
  %s3 = inlined_call_operand.vmem [shape: f32[8,1], index: 3, kind: output, shape index: {1}]
  %4 = xla_tuple %s2, %s3
  %s5 = sld [smem:[#allocation0]]
  $region26: #{_avg_pool_group.1} parent=0
    _
  %s7 = ssub.s32 1, %s5
  %s8 = scalar_select 0, %s7, %s5
  // Predicated region
  $region2: #{_avg_pool_group.1} parent=0 // pred_check
    _
  $region3: #{_avg_pool_group.1} parent=0 // pred_check_branch
    %10 = sbr.rel (0) target = $region5
  $region4: #{_avg_pool_group.1} parent=0 // pred_region
    _
  $region5: #{_avg_pool_group.1} parent=0 // pred_fallthru
    _
  // Predicated region
  $region6: #{_avg_pool_group.1} parent=0 // pred_check
    _
  $region7: #{_avg_pool_group.1} parent=0 // pred_check_branch
    %12 = sbr.rel (0) target = $region9
  $region8: #{_avg_pool_group.1} parent=0 // pred_region
    _
  $region9: #{_avg_pool_group.1} parent=0 // pred_fallthru
    _
  %v13 = vld [vmem:[%s0] sm:$0xff]
  %v14 = vld [vmem:[%s0 + $0x8] sm:$0xff]
  %v15 = vadd.f32 %v13, %v14
  %16 = vadd.xlane.f32.xlu0 %v15
  %v17 = vpop.xlane.xlu0 %16
  %v18 = vmul.f32 %v17, 0.00390625
  %vm19 = vcmask 7168
  %20 = vst.msk [vmem:[%s2] sm:$0xff] %vm19, %v18
  %v21 = vld [vmem:[%s1] sm:$0xff]
  %v22 = vld [vmem:[%s1 + $0x8] sm:$0xff]
  %v23 = vadd.f32 %v21, %v22
  %24 = vadd.xlane.f32.xlu0 %v23
  %v25 = vpop.xlane.xlu0 %24
  %v26 = vmul.f32 %v25, 0.00390625
  %27 = vst.msk [vmem:[%s3] sm:$0xff] %vm19, %v26
  // Predicated region
  $region10: #{_avg_pool_group.1} parent=0 // pred_check
    _
  $region11: #{_avg_pool_group.1} parent=0 // pred_check_branch
    %29 = sbr.rel (0) target = $region13
  $region12: #{_avg_pool_group.1} parent=0 // pred_region
    _
  $region13: #{_avg_pool_group.1} parent=0 // pred_fallthru
    _
  // Predicated region
  $region14: #{_avg_pool_group.1} parent=0 // pred_check
    _
  $region15: #{_avg_pool_group.1} parent=0 // pred_check_branch
    %31 = sbr.rel (0) target = $region17
  $region16: #{_avg_pool_group.1} parent=0 // pred_region
    _
  $region17: #{_avg_pool_group.1} parent=0 // pred_fallthru
    _
  // Predicated region
  $region18: #{_avg_pool_group.1} parent=0 // pred_check
    _
  $region19: #{_avg_pool_group.1} parent=0 // pred_check_branch
    %33 = sbr.rel (0) target = $region21
  $region20: #{_avg_pool_group.1} parent=0 // pred_region
    _
  $region21: #{_avg_pool_group.1} parent=0 // pred_fallthru
    _
  // Predicated region
  $region22: #{_avg_pool_group.1} parent=0 // pred_check
    _
  $region23: #{_avg_pool_group.1} parent=0 // pred_check_branch
    %35 = sbr.rel (0) target = $region25
  $region24: #{_avg_pool_group.1} parent=0 // pred_region
    _
  $region25: #{_avg_pool_group.1} parent=0 // pred_fallthru
    _

</llo_original>
